<compile_context>
chip_gen: v5e
topology: v5e:2x2
jax: 0.10.0
libtpu: 0.0.40
codegen_flags: <defaults>
</compile_context>

<pallas_src>
import jax
import jax.numpy as jnp
from jax.experimental import pallas as pl
from jax.experimental.pallas import tpu as pltpu


def _round_up(x, m):
    return ((x + m - 1) // m) * m


def _pad_axis_to(x, axis, target):
    pad = target - x.shape[axis]
    if pad == 0:
        return x
    widths = [(0, 0)] * x.ndim
    widths[axis] = (0, pad)
    return jnp.pad(x, widths)


def _im2col(x, patch_size):
    """(B, C, H, W) -> (B*n_patches, C*P*P); patches flattened in (c, kh, kw) order."""
    B, C, H, W = x.shape
    P = patch_size
    Hp, Wp = H // P, W // P
    xp = x.reshape(B, C, Hp, P, Wp, P)
    xp = jnp.transpose(xp, (0, 2, 4, 1, 3, 5))
    return xp.reshape(B * Hp * Wp, C * P * P)


def _sublane_align(dtype):
    # Native sublane packing: 8 rows for 4-byte dtypes, 16 for bf16, 32 for 1-byte.
    return max(8, 32 // jnp.dtype(dtype).itemsize)


def _vmem_budget_bytes():
    """Per-core VMEM budget for the kernel's working set (generation-aware)."""
    try:
        phys = pltpu.get_tpu_info().vmem_capacity_bytes
    except Exception:
        phys = 64 * 1024 * 1024  # conservative: v7x physical VMEM per TC
    return min(phys // 2, 48 * 1024 * 1024)


def _tile_cap_from_vmem(Kp, Np, in_bytes, out_bytes, budget):
    """Largest TM whose double-buffered working set fits the VMEM budget."""
    fixed = 2 * Kp * Np * in_bytes + 2 * Np * 4       # resident weight (x2 safety) + bias
    per_row = 2 * Kp * in_bytes + 2 * Np * out_bytes  # double-buffered x tile + out tile
    avail = budget - fixed
    if avail <= 0:
        return 8
    return max(8, (avail // per_row // 8) * 8)


def _choose_tile_m(M, cap, align, target_grid):
    """Pick TM (multiple of `align`).  Prefer a divisor of M (no row padding, no
    post-kernel slice copy) while keeping >= target_grid steps for megacore/pipelining."""
    cap = max(align, (cap // align) * align)
    desired = max(align, min(cap, _round_up(pl.cdiv(M, target_grid), align)))
    if M % align == 0:
        tm = align
        for cand in range(align, desired + 1, align):
            if M % cand == 0:
                tm = cand
        return tm, M
    tm = min(desired, _round_up(M, align))
    return tm, _round_up(M, tm)


def _patch_embed_kernel(x_ref, w_ref, b_ref, o_ref):
    # x_ref: (TM, Kp) bf16, w_ref: (Kp, Np) bf16, b_ref: (1, Np) f32,
    # o_ref: (TM, Np) out_dtype.  f32 accumulation on the MXU.
    acc = jnp.dot(x_ref[...], w_ref[...], preferred_element_type=jnp.float32)
    o_ref[...] = (acc + b_ref[...]).astype(o_ref.dtype)


def prepare_patch_embed_params(weight, bias, compute_dtype=jnp.bfloat16):
    """Conv weight (E, C, P, P) / bias (E,) -> padded (Kp, Np) bf16 / (1, Np) f32.

    Call once at parameter-load time; the result is reused by every forward call.
    """
    E, C, P, _ = weight.shape
    K = C * P * P
    Kp = _round_up(K, 128)
    Np = _round_up(E, 128)
    w2 = weight.reshape(E, K).T                       # (K, E), matches (c, kh, kw) order
    w2 = _pad_axis_to(_pad_axis_to(w2, 0, Kp), 1, Np).astype(compute_dtype)
    b2 = _pad_axis_to(bias.reshape(1, E).astype(jnp.float32), 1, Np)
    return w2, b2


def patch_embedding(x, w2, b2, embed_dim, patch_size, *,
                    out_dtype=jnp.bfloat16, tile_m=1024, target_grid=16):
    """x: (B, C, H, W); w2/b2 from prepare_patch_embed_params.
    Returns (B, n_patches, embed_dim) in out_dtype."""
    B, C, H, W = x.shape
    P = patch_size
    E = embed_dim
    assert H % P == 0 and W % P == 0
    Hp, Wp = H // P, W // P
    n_patches = Hp * Wp
    M = B * n_patches
    K = C * P * P

    Kp, Np = w2.shape
    assert Kp == _round_up(K, 128) and Np == _round_up(E, 128)
    assert b2.shape == (1, Np)

    compute_dtype = w2.dtype
    in_bytes = jnp.dtype(compute_dtype).itemsize
    out_bytes = jnp.dtype(out_dtype).itemsize
    align = max(_sublane_align(compute_dtype), _sublane_align(out_dtype))

    budget = _vmem_budget_bytes()
    cap = min(tile_m, _tile_cap_from_vmem(Kp, Np, in_bytes, out_bytes, budget))
    TM, Mp = _choose_tile_m(M, cap, align, target_grid)

    # im2col glue (plain JAX).  With allow_input_fusion below, XLA may fuse this
    # producer into the kernel's input DMA instead of materializing it in HBM.
    xp = _im2col(x, P)
    xp = _pad_axis_to(_pad_axis_to(xp, 0, Mp), 1, Kp).astype(compute_dtype)

    grid = (Mp // TM,)

    # Derive the VMEM limit from the actual working set (double-buffered x and
    # out tiles, resident weight counted twice for safety, bias).
    working = (2 * TM * Kp * in_bytes + 2 * TM * Np * out_bytes
               + 2 * Kp * Np * in_bytes + 2 * Np * 4)
    vmem_limit = int(min(max(working + (4 << 20), 16 << 20), budget + (8 << 20)))

    cost = pl.CostEstimate(
        flops=2 * Mp * Kp * Np,
        transcendentals=0,
        bytes_accessed=(Mp * Kp + Kp * Np) * in_bytes + Mp * Np * out_bytes + Np * 4,
    )

    out = pl.pallas_call(
        _patch_embed_kernel,
        out_shape=jax.ShapeDtypeStruct((Mp, Np), out_dtype),
        grid_spec=pltpu.PrefetchScalarGridSpec(
            num_scalar_prefetch=0,
            grid=grid,
            in_specs=[
                pl.BlockSpec((TM, Kp), lambda i: (i, 0)),
                pl.BlockSpec((Kp, Np), lambda i: (0, 0)),   # weight stays resident
                pl.BlockSpec((1, Np), lambda i: (0, 0)),    # bias stays resident
            ],
            out_specs=pl.BlockSpec((TM, Np), lambda i: (i, 0)),
        ),
        compiler_params=pltpu.CompilerParams(
            dimension_semantics=("parallel",),      # shards row-tiles across TCs on v7x
            vmem_limit_bytes=vmem_limit,            # working-set derived, v7x-safe
            allow_input_fusion=[True, False, False],  # fuse im2col producer into DMA
        ),
        cost_estimate=cost,
    )(xp, w2, b2)

    # Only slice when padding was actually added (slicing a padded array copies).
    if Mp != M:
        out = out[:M]
    if Np != E:
        out = out[:, :E]
    return out.reshape(B, n_patches, E)


def patch_embedding_from_conv(x, weight, bias, patch_size, **kwargs):
    """Convenience wrapper (re-prepares params every call; prefer hoisting)."""
    w2, b2 = prepare_patch_embed_params(weight, bias)
    return patch_embedding(x, w2, b2, weight.shape[0], patch_size, **kwargs)


def reference_conv(x, weight, bias, patch_size):
    """Pure-JAX f32 reference matching PyTorch Conv2d(stride=kernel) + flatten + transpose."""
    y = jax.lax.conv_general_dilated(
        x, weight,
        window_strides=(patch_size, patch_size),
        padding="VALID",
        dimension_numbers=("NCHW", "OIHW", "NCHW"),
    ) + bias.reshape(1, -1, 1, 1)
    B, E, Hp, Wp = y.shape
    return jnp.transpose(y.reshape(B, E, Hp * Wp), (0, 2, 1))


if __name__ == "__main__":
    # Small shapes consistent with the module: img_size=16, patch_size=4,
    # in_chans=4, embed_dim=32 -> n_patches = 16.
    B, C, H, W = 2, 4, 16, 16
    P = 4
    E = 32

    key = jax.random.PRNGKey(0)
    kx, kw_, kb = jax.random.split(key, 3)
    x = jax.random.normal(kx, (B, C, H, W), dtype=jnp.float32)
    fan_in = C * P * P
    bound = 1.0 / (fan_in ** 0.5)
    weight = jax.random.uniform(kw_, (E, C, P, P), minval=-bound, maxval=bound,
                                dtype=jnp.float32)
    bias = jax.random.uniform(kb, (E,), minval=-bound, maxval=bound,
                              dtype=jnp.float32)

    n_patches = (H // P) * (W // P)

    # Param prep hoisted out of the per-call path (done once at load time).
    w2, b2 = prepare_patch_embed_params(weight, bias)

    # f32 output (module-exact dtype), default tiling (grid > 1 at this size).
    fwd_f32 = jax.jit(lambda x, w2, b2: patch_embedding(
        x, w2, b2, E, P, out_dtype=jnp.float32))
    # bf16 output (default / production path).
    fwd_bf16 = jax.jit(lambda x, w2, b2: patch_embedding(x, w2, b2, E, P))
    # Single-tile variant to exercise the other end of the tiling logic.
    fwd_single = jax.jit(lambda x, w2, b2: patch_embedding(
        x, w2, b2, E, P, out_dtype=jnp.float32, target_grid=1))

    out = jax.block_until_ready(fwd_f32(x, w2, b2))
    out_bf16 = jax.block_until_ready(fwd_bf16(x, w2, b2))
    out_single = jax.block_until_ready(fwd_single(x, w2, b2))

    assert out.shape == (B, n_patches, E), out.shape
    assert out_single.shape == (B, n_patches, E), out_single.shape
    assert out_bf16.shape == (B, n_patches, E) and out_bf16.dtype == jnp.bfloat16

    # Tight check: same bf16-rounded inputs, f32 accumulation (matches kernel math).
    xp = _im2col(x, P)
    w_mat = weight.reshape(E, C * P * P).T
    ref_tight = (
        jnp.dot(xp.astype(jnp.bfloat16).astype(jnp.float32),
                w_mat.astype(jnp.bfloat16).astype(jnp.float32))
        + bias[None, :]
    ).reshape(B, n_patches, E)
    assert jnp.allclose(out, ref_tight, atol=1e-4, rtol=1e-4), "mismatch vs bf16 matmul ref"
    assert jnp.allclose(out_single, ref_tight, atol=1e-4, rtol=1e-4), "single-tile mismatch"
    assert jnp.allclose(out_bf16.astype(jnp.float32), ref_tight, atol=3e-2, rtol=3e-2), \
        "bf16-output mismatch vs bf16 matmul ref"

    # Loose check vs the f32 Conv2d(stride=kernel) module semantics (bf16 input rounding).
    ref = jax.block_until_ready(reference_conv(x, weight, bias, P))
    assert jnp.allclose(out, ref, atol=5e-2, rtol=5e-2), "mismatch vs f32 conv reference"

    print("KERNEL_OK")
</pallas_src>

<mosaic_0001>
module attributes {stable_mosaic.version = 11 : i64} {
  func.func @_patch_embed_kernel(%arg0: i32, %arg1: memref<16x128xbf16, #tpu.memory_space<vmem>>, %arg2: memref<128x128xbf16, #tpu.memory_space<vmem>>, %arg3: memref<1x128xf32, #tpu.memory_space<vmem>>, %arg4: memref<16x128xf32, #tpu.memory_space<vmem>>) attributes {dimension_semantics = [#tpu.dimension_semantics<parallel>], iteration_bounds = array<i64: 2>, scalar_prefetch = 0 : i64, scratch_operands = 0 : i64, tpu.core_type = #tpu.core_type<tc>, window_params = [{transform_indices = @transform_0, window_bounds = array<i64: 16, 128>}, {pipeline_mode = #tpu.pipeline_mode<synchronous>, transform_indices = @transform_1, window_bounds = array<i64: 128, 128>}, {pipeline_mode = #tpu.pipeline_mode<synchronous>, transform_indices = @transform_2, window_bounds = array<i64: 1, 128>}, {transform_indices = @transform_3, window_bounds = array<i64: 16, 128>}]} {
    %c0 = arith.constant 0 : index
    %c0_0 = arith.constant 0 : index
    %0 = vector.load %arg1[%c0, %c0_0] : memref<16x128xbf16, #tpu.memory_space<vmem>>, vector<16x128xbf16>
    %c0_1 = arith.constant 0 : index
    %c0_2 = arith.constant 0 : index
    %1 = vector.load %arg2[%c0_1, %c0_2] : memref<128x128xbf16, #tpu.memory_space<vmem>>, vector<128x128xbf16>
    %cst = arith.constant dense<0.000000e+00> : vector<16x128xf32>
    %2 = tpu.matmul %0, %1, %cst {dimension_numbers = #tpu.dot_dimension_numbers<[1], [0], [0], [1], [0, 0, 1, 1], [], []>} : vector<16x128xbf16>, vector<128x128xbf16>, vector<16x128xf32> -> vector<16x128xf32>
    %c0_3 = arith.constant 0 : index
    %c0_4 = arith.constant 0 : index
    %3 = vector.load %arg3[%c0_3, %c0_4] : memref<1x128xf32, #tpu.memory_space<vmem>>, vector<1x128xf32>
    %4 = vector.broadcast %3 : vector<1x128xf32> to vector<16x128xf32>
    %5 = arith.addf %2, %4 : vector<16x128xf32>
    %c0_5 = arith.constant 0 : index
    %c0_6 = arith.constant 0 : index
    %6 = vector.load %arg4[%c0_5, %c0_6] : memref<16x128xf32, #tpu.memory_space<vmem>>, vector<16x128xf32>
    tpu.vector_store %arg4[%c0_5, %c0_6], %5 {strides = array<i32>} : memref<16x128xf32, #tpu.memory_space<vmem>>, vector<16x128xf32>,
    return
  }
  func.func @transform_0(%arg0: i32) -> (i32, i32) {
    %c0_i32 = arith.constant 0 : i32
    %c0_i32_0 = arith.constant 0 : i32
    return %arg0, %c0_i32 : i32, i32
  }
  func.func @transform_1(%arg0: i32) -> (i32, i32) {
    %c0_i32 = arith.constant 0 : i32
    %c0_i32_0 = arith.constant 0 : i32
    %c0_i32_1 = arith.constant 0 : i32
    return %c0_i32, %c0_i32_0 : i32, i32
  }
  func.func @transform_2(%arg0: i32) -> (i32, i32) {
    %c0_i32 = arith.constant 0 : i32
    %c0_i32_0 = arith.constant 0 : i32
    %c0_i32_1 = arith.constant 0 : i32
    return %c0_i32, %c0_i32_0 : i32, i32
  }
  func.func @transform_3(%arg0: i32) -> (i32, i32) {
    %c0_i32 = arith.constant 0 : i32
    %c0_i32_0 = arith.constant 0 : i32
    return %arg0, %c0_i32 : i32, i32
  }
}

</mosaic_0001>

<llo_original>
// kernel: _lambda_.2
$region0: #{_lambda_.2}
  #allocation0 [shape = 'u32[]', space=smem, size = 0x4, offset = 0x4, fixed_abs, tag = 'smem constant byte address 0x4 - core index']
  #allocation1 [shape = 'u32[72,128]{1,0:T(1,128)}', space=vmem, size = 0x9000, scoped, tag = 'internal scratch']
  #allocation2 [shape = 'u32[2048]{0}', space=vmem, size = 0x2000, scoped, tag = 'scoped memory for _lambda_.2']
  #allocation3 [shape = 'u32[2048]{0}', space=vmem, size = 0x2000, scoped, tag = 'scoped memory for _lambda_.2']
  #allocation4 [shape = 'u32[2048]{0}', space=vmem, size = 0x2000, scoped, tag = 'scoped memory for _lambda_.2']
  #allocation5 [shape = 'u32[2048]{0}', space=vmem, size = 0x2000, scoped, tag = 'scoped memory for _lambda_.2']
  #allocation6 [shape = 'u32[2048]{0}', space=vmem, size = 0x2000, scoped, tag = 'scoped memory for _lambda_.2']
  %s0 = inlined_call_operand.vmem [shape: bf16[128,128], index: 0, kind: input, shape index: {}]
  %s1 = inlined_call_operand.vmem [shape: f32[1,128], index: 1, kind: input, shape index: {}]
  %s2 = inlined_call_operand.vmem [shape: bf16[32,64], index: 2, kind: input, shape index: {}]
  %s3 = inlined_call_operand.<no memory space> [shape: bf16[], index: 3, kind: input, shape index: {}]
  %s4 = inlined_call_operand.hbm [shape: f32[32,128], index: 4, kind: output, shape index: {}]
  %s5 = sld [smem:[#allocation0]]
  $region45: #{_lambda_.2} parent=0
    _
  %s7 = ssub.s32 1, %s5
  %s8 = scalar_select 0, %s7, %s5
  %v9 = vstv %s3
  %v10 = vunpack.i.l.bf16 %v9
  %v12 = vunpack.i.h.bf16 %v9
  $region1: #{_lambda_.2} parent=0
    #allocation7 [shape = 'u8[16384]{0}', space=vmem, size = 0x4000, scoped, tag = 'output window, operand 0']
    #allocation8 [shape = 's32[2]{0}', space=sflag, size = 0x8, scoped, tag = 'scoped memory for _lambda_.2']
    %14 = vsyncpa [#allocation8], 0
    %s15 = scalar_lea.sflag [#allocation8], 1
    %16 = vsyncpa %s15, 0
    loop: start=0, step=1, limit=4
    $region2: #{_lambda_.2} parent=1 // loop_pre_header
      _
    $region3: #{_lambda_.2} parent=1 // loop_header
      %s18 = sphi 0, %s22
      %p19 = scmp.ge.s32.totalorder %s18, 4
      %s28 = sphi 0, %s30
      %s31 = sphi 0, %s28
      %s32 = sphi 0, %s31
      %s48 = sphi 0, %s32
      %s52 = sphi 0, %s52
      %s54 = sphi 0, %s52
      %s55 = sphi 0, %s54
      %s69 = sphi 0, %s55
      %s73 = sphi 0, %s73
      %s75 = sphi 0, %s73
      %s76 = sphi 0, %s75
      %s90 = sphi 0, %s76
      %s96 = sphi 0, %s98
      %s99 = sphi 0, %s96
      %s100 = sphi 0, %s99
      %s116 = sphi 0, %s100
    $region4: #{_lambda_.2} parent=1 // loop_header_branch
      %21 = sbr.rel (%p19) target = $region8
    $region5: #{_lambda_.2} parent=1 // loop_body
      %s23 = ssub.s32 %s18, 1
      %s24 = ssub.s32 %s18, 2
      %s25 = sadd.s32 %s18, 1
      %s26 = ssub.s32 %s18, %s25
      %p27 = scmp.eq.s32.totalorder %s26, 0
      %s29 = sadd.s32 %s28, 1
      %s30 = scalar_select %p27, %s28, %s29
      %p33 = pneg %p27
      %p34 = scmp.eq.s32.totalorder %s18, 1
      %p35 = por %p33, %p34
      %p36 = scmp.ne.s32.totalorder %s28, %s31
      %p37 = scmp.eq.s32.totalorder %s18, 0
      %p38 = por %p36, %p37
      %p39 = scmp.ne.s32.totalorder %s28, %s31
      %p40 = scmp.eq.s32.totalorder %s23, 1
      %p41 = por %p39, %p40
      %p42 = scmp.ne.s32.totalorder %s31, %s32
      %p43 = scmp.eq.s32.totalorder %s23, 0
      %p44 = por %p42, %p43
      %p45 = scmp.ne.s32.totalorder %s31, %s32
      %p46 = scmp.eq.s32.totalorder %s24, 1
      %p47 = por %p45, %p46
      %p49 = scmp.ne.s32.totalorder %s32, %s48
      %p50 = scmp.eq.s32.totalorder %s24, 0
      %p51 = por %p49, %p50
      %s53 = sadd.s32 %s52, 1
      %p56 = scmp.eq.s32.totalorder %s18, 1
      %p57 = scmp.ne.s32.totalorder %s52, %s54
      %p58 = scmp.eq.s32.totalorder %s18, 0
      %p59 = por %p57, %p58
      %p60 = scmp.ne.s32.totalorder %s52, %s54
      %p61 = scmp.eq.s32.totalorder %s23, 1
      %p62 = por %p60, %p61
      %p63 = scmp.ne.s32.totalorder %s54, %s55
      %p64 = scmp.eq.s32.totalorder %s23, 0
      %p65 = por %p63, %p64
      %p66 = scmp.ne.s32.totalorder %s54, %s55
      %p67 = scmp.eq.s32.totalorder %s24, 1
      %p68 = por %p66, %p67
      %p70 = scmp.ne.s32.totalorder %s55, %s69
      %p71 = scmp.eq.s32.totalorder %s24, 0
      %p72 = por %p70, %p71
      %s74 = sadd.s32 %s73, 1
      %p77 = scmp.eq.s32.totalorder %s18, 1
      %p78 = scmp.ne.s32.totalorder %s73, %s75
      %p79 = scmp.eq.s32.totalorder %s18, 0
      %p80 = por %p78, %p79
      %p81 = scmp.ne.s32.totalorder %s73, %s75
      %p82 = scmp.eq.s32.totalorder %s23, 1
      %p83 = por %p81, %p82
      %p84 = scmp.ne.s32.totalorder %s75, %s76
      %p85 = scmp.eq.s32.totalorder %s23, 0
      %p86 = por %p84, %p85
      %p87 = scmp.ne.s32.totalorder %s75, %s76
      %p88 = scmp.eq.s32.totalorder %s24, 1
      %p89 = por %p87, %p88
      %p91 = scmp.ne.s32.totalorder %s76, %s90
      %p92 = scmp.eq.s32.totalorder %s24, 0
      %p93 = por %p91, %p92
      %s94 = ssub.s32 %s18, %s25
      %p95 = scmp.eq.s32.totalorder %s94, 0
      %s97 = sadd.s32 %s96, 1
      %s98 = scalar_select %p95, %s96, %s97
      %p101 = pneg %p95
      %p102 = scmp.eq.s32.totalorder %s18, 1
      %p103 = por %p101, %p102
      %p104 = scmp.ne.s32.totalorder %s96, %s99
      %p105 = scmp.eq.s32.totalorder %s18, 0
      %p106 = por %p104, %p105
      %p107 = scmp.ne.s32.totalorder %s96, %s99
      %p108 = scmp.eq.s32.totalorder %s23, 1
      %p109 = por %p107, %p108
      %p110 = scmp.ne.s32.totalorder %s99, %s100
      %p111 = scmp.eq.s32.totalorder %s23, 0
      %p112 = por %p110, %p111
      %p113 = scmp.ne.s32.totalorder %s99, %s100
      %p114 = scmp.eq.s32.totalorder %s24, 1
      %p115 = por %p113, %p114
      %p117 = scmp.ne.s32.totalorder %s100, %s116
      %p118 = scmp.eq.s32.totalorder %s24, 0
      %p119 = por %p117, %p118
      %p120 = scmp.le.s32.totalorder 1, %s18
      %p121 = scmp.lt.s32.totalorder %s18, 3
      %p122 = pnand %p120, %p121
      %p123 = pneg %p122
      // Predicated region
      $region9: #{_lambda_.2} parent=5 // pred_check
        _
      $region10: #{_lambda_.2} parent=5 // pred_check_branch
        %125 = sbr.rel (%p122) target = $region12
      $region11: #{_lambda_.2} parent=5 // pred_region
        %s126 = ssub.s32 %s18, 1
        // Predicated region
        $region13: #{_lambda_.2} parent=11 // pred_check
          %p127 = pneg %p65
        $region14: #{_lambda_.2} parent=11 // pred_check_branch
          %129 = sbr.rel (%p127) target = $region16
        $region15: #{_lambda_.2} parent=11 // pred_region
          _
        $region16: #{_lambda_.2} parent=11 // pred_fallthru
          _
        // Predicated region
        $region17: #{_lambda_.2} parent=11 // pred_check
          %p130 = pneg %p86
        $region18: #{_lambda_.2} parent=11 // pred_check_branch
          %132 = sbr.rel (%p130) target = $region20
        $region19: #{_lambda_.2} parent=11 // pred_region
          _
        $region20: #{_lambda_.2} parent=11 // pred_fallthru
          _
      $region12: #{_lambda_.2} parent=5 // pred_fallthru
        _
      %p133 = scmp.lt.s32.totalorder %s18, 2
      // Predicated region
      $region21: #{_lambda_.2} parent=5 // pred_check
        %p134 = pneg %p133
      $region22: #{_lambda_.2} parent=5 // pred_check_branch
        %136 = sbr.rel (%p134) target = $region24
      $region23: #{_lambda_.2} parent=5 // pred_region
        // Predicated region
        $region25: #{_lambda_.2} parent=23 // pred_check
          %p137 = pneg %p38
        $region26: #{_lambda_.2} parent=23 // pred_check_branch
          %139 = sbr.rel (%p137) target = $region28
        $region27: #{_lambda_.2} parent=23 // pred_region
          %s140 = smul.u32 2, %s18
          %p141 = scmp.lt.s32.totalorder %s140, 3
          %s142 = scalar_select %p141, %s140, 3
          %s143 = smul.addr %s142, 4
          %s144 = scalar_lea.vmem %s2, %s143
          %s145 = smul.u32 2, %s18
        $region28: #{_lambda_.2} parent=23 // pred_fallthru
          _
      $region24: #{_lambda_.2} parent=5 // pred_fallthru
        _
      %p146 = scmp.le.s32.totalorder 1, %s18
      %p147 = scmp.lt.s32.totalorder %s18, 3
      %p148 = pnand %p146, %p147
      %p149 = pneg %p148
      // Predicated region
      $region29: #{_lambda_.2} parent=5 // pred_check
        _
      $region30: #{_lambda_.2} parent=5 // pred_check_branch
        %151 = sbr.rel (%p148) target = $region32
      $region31: #{_lambda_.2} parent=5 // pred_region
        #allocation9 [shape = 'u8[4096]{0}', space=vmem, size = 0x1000, dematerialized = true, scoped, tag = 'FusionAdapter Buffer %fusion.1 = bf16[32,128]{1,0:T(8,128)(2,1)} fusion(%param_2.1, %param_3), kind=kLoop, calls=%fused_computation.2.clone, metadata={op_name="jit(<lambda>)/jit(_pad)/pad" stack_frame_id=14}']
        %s152 = ssub.s32 %s18, 1
        %s153 = smul.u32 2, %s23
        %p154 = scmp.lt.s32.totalorder %s153, 3
        %s155 = scalar_select %p154, %s153, 3
        %s156 = smul.addr %s155, 4
        %s157 = scalar_lea.vmem %s2, %s156
        %p158 = pneg %p44
        %p159 = pneg %p41
        %p160 = pneg %p65
        %p161 = pneg %p62
        %p162 = pneg %p86
        %p163 = pneg %p83
        %p164 = pneg %p112
        %p165 = pneg %p109
        %s166 = sand.u32 %s99, 1
        %s167 = scalar_lea.sflag [#allocation8], %s166
        %s168 = sand.u32 %s99, 1
        %s169 = smul.addr %s168, 16
        %s170 = scalar_lea.vmem [#allocation7], %s169
        %s171 = smul.u32 2, %s23
        %p172 = scmp.lt.s32.totalorder %s171, 3
        %s173 = scalar_select %p172, %s171, 3
        %s174 = smul.addr %s173, 4
        %s175 = scalar_lea.vmem %s2, %s174
        %s176 = smul.u32 2, %s23
        %s177 = smul.u32 2, %s23
        %s179 = sor.u32 255, 127
        %s180 = sand.u32 %s179, 85
        %s181 = sshrl.u32 %s180, 1
        %s182 = sor.u32 %s180, %s181
        %s183 = sand.u32 51, %s182
        %s184 = sshrl.u32 %s183, 2
        %s185 = sor.u32 %s183, %s184
        %s186 = sand.u32 15, %s185
        %v187 = vld [vmem:[%s175] sm:%s186]
        %v188 = vunpack.c.l.bf16 %v187
        %v189 = vunpack.c.h.bf16 %v187
        %v190 = vlaneseq
        %v191 = vand.u32 %v190, 127
        %vm193 = vcmp.lt.s32.totalorder %v191, 64
        %v194 = vsel %vm193, %v188, %v10
        %v195 = vpack.c.bf16 0.0, %v194
        %s197 = ssub.s32 16, 1
        %198 = vst [vmem:[#allocation9] sm:%s197] %v195
        %s199 = scalar_lea.vmem %s175, 4
        %s201 = sor.u32 255, 127
        %s202 = sand.u32 %s201, 85
        %s203 = sshrl.u32 %s202, 1
        %s204 = sor.u32 %s202, %s203
        %s205 = sand.u32 51, %s204
        %s206 = sshrl.u32 %s205, 2
        %s207 = sor.u32 %s205, %s206
        %s208 = sand.u32 15, %s207
        %v209 = vld [vmem:[%s199] sm:%s208]
        %v210 = vunpack.c.l.bf16 %v209
        %v211 = vunpack.c.h.bf16 %v209
        %v212 = vlaneseq
        %v213 = vand.u32 %v212, 127
        %vm215 = vcmp.lt.s32.totalorder %v213, 64
        %v216 = vsel %vm215, %v210, %v10
        %s217 = scalar_lea.vmem [#allocation9], 4
        %v218 = vpack.c.bf16 0.0, %v216
        %s220 = ssub.s32 16, 1
        %221 = vst [vmem:[%s217] sm:%s220] %v218
        %v222 = vld [vmem:[#allocation9] sm:$0xf]
        %v223 = vld [vmem:[#allocation9 + $0x4] sm:$0xf]
        %v224 = vld [vmem:[%s0] sm:$0xf]
        %v225 = vld [vmem:[%s0 + $0x4] sm:$0xf]
        %v226 = vld [vmem:[%s0 + $0x8] sm:$0xf]
        %v227 = vld [vmem:[%s0 + $0xc] sm:$0xf]
        %v228 = vld [vmem:[%s0 + $0x10] sm:$0xf]
        %v229 = vld [vmem:[%s0 + $0x14] sm:$0xf]
        %v230 = vld [vmem:[%s0 + $0x18] sm:$0xf]
        %v231 = vld [vmem:[%s0 + $0x1c] sm:$0xf]
        %v232 = vld [vmem:[%s0 + $0x20] sm:$0xf]
        %v233 = vld [vmem:[%s0 + $0x24] sm:$0xf]
        %v234 = vld [vmem:[%s0 + $0x28] sm:$0xf]
        %v235 = vld [vmem:[%s0 + $0x2c] sm:$0xf]
        %v236 = vld [vmem:[%s0 + $0x30] sm:$0xf]
        %v237 = vld [vmem:[%s0 + $0x34] sm:$0xf]
        %v238 = vld [vmem:[%s0 + $0x38] sm:$0xf]
        %v239 = vld [vmem:[%s0 + $0x3c] sm:$0xf]
        %v240 = vld [vmem:[%s1] sm:$0x1]
        %v242 = vperm.slane %v240, 0
        %v246 = vunpack.c.l.b16 %v222
        %v247 = vunpack.c.l.b16 %v223
        %v248 = vpack.c.b16 %v247, %v246
        %v266 = vunpack.c.l.b16 %v224
        %v267 = vunpack.c.l.b16 %v225
        %v268 = vunpack.c.l.b16 %v226
        %v269 = vunpack.c.l.b16 %v227
        %v270 = vunpack.c.l.b16 %v228
        %v271 = vunpack.c.l.b16 %v229
        %v272 = vunpack.c.l.b16 %v230
        %v273 = vunpack.c.l.b16 %v231
        %v274 = vunpack.c.l.b16 %v232
        %v275 = vunpack.c.l.b16 %v233
        %v276 = vunpack.c.l.b16 %v234
        %v277 = vunpack.c.l.b16 %v235
        %v278 = vunpack.c.l.b16 %v236
        %v279 = vunpack.c.l.b16 %v237
        %v280 = vunpack.c.l.b16 %v238
        %v281 = vunpack.c.l.b16 %v239
        %v282 = vpack.c.b16 %v267, %v266
        %v283 = vpack.c.b16 %v269, %v268
        %v284 = vpack.c.b16 %v271, %v270
        %v285 = vpack.c.b16 %v273, %v272
        %v286 = vpack.c.b16 %v275, %v274
        %v287 = vpack.c.b16 %v277, %v276
        %v288 = vpack.c.b16 %v279, %v278
        %v289 = vpack.c.b16 %v281, %v280
        %298 = vmatpush.bf16.msra.mxu0 %v289
        %299 = vmatpush.bf16.msra.mxu0 %v288
        %300 = vmatpush.bf16.msra.mxu0 %v287
        %301 = vmatpush.bf16.msra.mxu0 %v286
        %302 = vmatpush.bf16.msra.mxu0 %v285
        %303 = vmatpush.bf16.msra.mxu0 %v284
        %304 = vmatpush.bf16.msra.mxu0 %v283
        %305 = vmatpush.bf16.msra.mxu0 %v282
        %306 = vmatmul.bf16.gmra.mxu0 %v248
        %v307 = vpop.f32.mrf.mxu0
        %v308 = vadd.f32 %v242, %v307
        %v309 = vpop.f32.mrf.mxu0
        %v310 = vadd.f32 %v242, %v309
        %311 = vdwg.mxu0
        %312 = vst [vmem:[%s170] sm:$0xff] %v308
        %313 = vst [vmem:[%s170 + $0x8] sm:$0xff] %v310
        %s314 = sand.u32 %s99, 1
        %s315 = scalar_lea.sflag [#allocation8], %s314
        %s316 = sand.u32 %s99, 1
        %s317 = smul.addr %s316, 16
        %s318 = scalar_lea.vmem [#allocation7], %s317
        // Predicated region
        $region33: #{_lambda_.2} parent=31 // pred_check
          %p319 = pneg %p109
        $region34: #{_lambda_.2} parent=31 // pred_check_branch
          %321 = sbr.rel (%p319) target = $region36
        $region35: #{_lambda_.2} parent=31 // pred_region
          %s322 = smul.u32 2, %s23
          %324 = vsyncadd %s315, 0
          %s325 = smul.addr %s322, 8
          %s326 = scalar_lea.hbm %s4, %s325
          %s327 = sshll.u32 %s318, 4
          %s328 = int_to_ptr.vmem [resolvable:$true] %s327
          %s329 = sshll.u32 %s326, 4
          %s330 = int_to_ptr.hbm [resolvable:$true] %s329
          %335 = dma.vmem_to_hbm [thread:$0]  %s328, 256, %s330, %s315, 128, 128, 8
        $region36: #{_lambda_.2} parent=31 // pred_fallthru
          _
      $region32: #{_lambda_.2} parent=5 // pred_fallthru
        _
      %p336 = scmp.le.s32.totalorder 2, %s18
      // Predicated region
      $region37: #{_lambda_.2} parent=5 // pred_check
        %p337 = pneg %p336
      $region38: #{_lambda_.2} parent=5 // pred_check_branch
        %339 = sbr.rel (%p337) target = $region40
      $region39: #{_lambda_.2} parent=5 // pred_region
        %s340 = ssub.s32 %s18, 2
        // Predicated region
        $region41: #{_lambda_.2} parent=39 // pred_check
          %p341 = pneg %p115
        $region42: #{_lambda_.2} parent=39 // pred_check_branch
          %343 = sbr.rel (%p341) target = $region44
        $region43: #{_lambda_.2} parent=39 // pred_region
          %s344 = sand.u32 %s100, 1
          %s345 = scalar_lea.sflag [#allocation8], %s344
          %s346 = sand.u32 %s100, 1
          %s347 = smul.addr %s346, 16
          %s348 = scalar_lea.vmem [#allocation7], %s347
          %350 = dma.done %s345, 256
        $region44: #{_lambda_.2} parent=39 // pred_fallthru
          _
      $region40: #{_lambda_.2} parent=5 // pred_fallthru
        _
    $region6: #{_lambda_.2} parent=1 // loop_footer
      %s22 = sadd.s32 1, %s18
    $region7: #{_lambda_.2} parent=1 // loop_footer_branch
      %17 = sbr.rel target = $region3
    $region8: #{_lambda_.2} parent=1 // loop_exit
      _
    %351 = vsyncpa [#allocation8], 1
    %s352 = scalar_lea.sflag [#allocation8], 1
    %353 = vsyncpa %s352, 1

</llo_original>
